<compile_context>
chip_gen: v6e
topology: v6e:2x2x1
jax: 0.10.0
libtpu: 0.0.40
codegen_flags: <defaults>
</compile_context>

<pallas_src>
import jax
import jax.numpy as jnp
from jax.experimental import pallas as pl
from jax.experimental.pallas import tpu as pltpu

_LANES = 128  # lane-dense output row width (one f32 vreg row)


def _distmult_kernel(rel_idx_ref, e1_ref, m_ref, e2_ref, o_ref):
    # rel_idx_ref: (B,) int32 in SMEM (consumed by the index_maps; unused here)
    # e1_ref: (F, 1)  entity-1 embedding as a column
    # m_ref : (F, F)  selected relation matrix (gathered by index_map)
    # e2_ref: (1, F)  entity-2 embedding as a row
    # o_ref : (1, _LANES) lane-dense output row
    del rel_idx_ref
    e1 = e1_ref[...].astype(jnp.float32)   # (F, 1)
    m = m_ref[...].astype(jnp.float32)     # (F, F)
    e2 = e2_ref[...].astype(jnp.float32)   # (1, F)
    # score = sum_{i,j} e1[i] * M[i, j] * e2[j]  — VPU multiplies + XLU reduce,
    # no MXU involvement at all.
    score = jnp.sum(e1 * m * e2)
    o_ref[...] = jnp.full((1, _LANES), jax.nn.sigmoid(score), dtype=o_ref.dtype)


def distmult_forward_batched(entity_1_embeddings, relation_indices,
                             entity_2_embeddings, relations_matrices):
    """Scores B (e1, r, e2) triples in one pallas_call.

    entity_*_embeddings: (B, F); relation_indices: (B,) int;
    relations_matrices: (R, F, F) in any float dtype (NOT cast in the wrapper —
    only the selected (F, F) block per triple is DMA'd and cast in-kernel).
    Returns (B,) float32 sigmoid scores.
    """
    e1 = jnp.asarray(entity_1_embeddings)
    e2 = jnp.asarray(entity_2_embeddings)
    B, F = e1.shape
    R = relations_matrices.shape[0]
    assert relations_matrices.shape == (R, F, F)
    assert e2.shape == (B, F)

    # Layouts chosen so every block's last two dims equal the full array dims.
    e1_cols = e1[:, :, None]                                   # (B, F, 1)
    e2_rows = e2[:, None, :]                                   # (B, 1, F)
    rel_idx = jnp.asarray(relation_indices, dtype=jnp.int32).reshape(B)

    grid_spec = pltpu.PrefetchScalarGridSpec(
        num_scalar_prefetch=1,
        grid=(B,),
        in_specs=[
            # e1 column for triple b -> kernel sees (F, 1)
            pl.BlockSpec((pl.Squeezed(), F, 1), lambda b, rel: (b, 0, 0)),
            # relation matrix gathered by the prefetched index -> (F, F)
            pl.BlockSpec((pl.Squeezed(), F, F), lambda b, rel: (rel[b], 0, 0)),
            # e2 row for triple b -> kernel sees (1, F)
            pl.BlockSpec((pl.Squeezed(), 1, F), lambda b, rel: (b, 0, 0)),
        ],
        # lane-dense (1, 128) output row per triple (unmasked vst)
        out_specs=pl.BlockSpec((pl.Squeezed(), 1, _LANES),
                               lambda b, rel: (b, 0, 0)),
    )

    out = pl.pallas_call(
        _distmult_kernel,
        out_shape=jax.ShapeDtypeStruct((B, 1, _LANES), jnp.float32),
        grid_spec=grid_spec,
        compiler_params=pltpu.CompilerParams(
            # independent per-triple steps: shard across TCs on v7x megacore
            dimension_semantics=("parallel",)),
    )(rel_idx, e1_cols, relations_matrices, e2_rows)

    return out[:, 0, 0]                                        # (B,)


def distmult_forward(entity_1_embedding, relation_index, entity_2_embedding,
                     relations_matrices):
    """Single-triple forward matching the PyTorch module:
    sigmoid(e1 @ relations_matrices[relation_index] @ e2). Returns a scalar."""
    scores = distmult_forward_batched(
        jnp.asarray(entity_1_embedding)[None, :],
        jnp.asarray(relation_index, dtype=jnp.int32).reshape(1),
        jnp.asarray(entity_2_embedding)[None, :],
        relations_matrices)
    return scores[0]


def init_relations_matrices(key, relations_count, features_count,
                            dtype=jnp.float32):
    # Mirrors the PyTorch __init__: each relation matrix is diag(randn(F)).
    # (The kernel itself does NOT assume diagonality — the parameter is dense.)
    diag_vals = jax.random.normal(key, (relations_count, features_count),
                                  dtype=jnp.float32)
    eye = jnp.eye(features_count, dtype=jnp.float32)
    return (diag_vals[:, :, None] * eye[None, :, :]).astype(dtype)  # (R, F, F)


# TODO(synk): DataManager from the PyTorch __init__ is unused in forward() and
# has no kernel-side equivalent; it is intentionally omitted.


if __name__ == "__main__":
    features_count = 128
    relations_count = 4
    batch = 4

    key = jax.random.PRNGKey(0)
    k_rel, k_e1, k_e2, k_idx = jax.random.split(key, 4)

    relations_matrices = init_relations_matrices(
        k_rel, relations_count, features_count)
    e1 = jax.random.normal(k_e1, (batch, features_count), dtype=jnp.float32)
    e2 = jax.random.normal(k_e2, (batch, features_count), dtype=jnp.float32)
    rel_idx = jax.random.randint(k_idx, (batch,), 0, relations_count,
                                 dtype=jnp.int32)

    # Batched path: one pallas_call scores all triples.
    scores = distmult_forward_batched(e1, rel_idx, e2, relations_matrices)
    scores = jax.block_until_ready(scores)

    ref = jax.nn.sigmoid(
        jnp.einsum("bf,bfg,bg->b", e1, relations_matrices[rel_idx], e2))
    assert jnp.allclose(scores, ref, atol=1e-5, rtol=1e-5), (scores, ref)

    # Single-triple path matching the PyTorch module's forward signature.
    single = distmult_forward(e1[0], rel_idx[0], e2[0], relations_matrices)
    single = jax.block_until_ready(single)
    assert jnp.allclose(single, ref[0], atol=1e-5, rtol=1e-5), (single, ref[0])

    print("KERNEL_OK")
</pallas_src>

<mosaic_0001>
module attributes {stable_mosaic.version = 11 : i64} {
  func.func @_distmult_kernel(%arg0: i32, %arg1: memref<4xi32, #tpu.memory_space<smem>>, %arg2: memref<1x128x1xf32, #tpu.memory_space<vmem>>, %arg3: memref<1x128x128xf32, #tpu.memory_space<vmem>>, %arg4: memref<1x1x128xf32, #tpu.memory_space<vmem>>, %arg5: memref<1x1x128xf32, #tpu.memory_space<vmem>>) attributes {dimension_semantics = [#tpu.dimension_semantics<parallel>], iteration_bounds = array<i64: 4>, scalar_prefetch = 1 : i64, scratch_operands = 0 : i64, tpu.core_type = #tpu.core_type<tc>, window_params = [{transform_indices = @transform_0, window_bounds = array<i64: 1, 128, 1>}, {transform_indices = @transform_1, window_bounds = array<i64: 1, 128, 128>}, {transform_indices = @transform_2, window_bounds = array<i64: 1, 1, 128>}, {transform_indices = @transform_3, window_bounds = array<i64: 1, 1, 128>}]} {
    %c0 = arith.constant 0 : index
    %c0_0 = arith.constant 0 : index
    %c0_1 = arith.constant 0 : index
    %0 = vector.load %arg2[%c0, %c0_0, %c0_1] : memref<1x128x1xf32, #tpu.memory_space<vmem>>, vector<1x128x1xf32>
    %1 = vector.shape_cast %0 : vector<1x128x1xf32> to vector<128x1xf32>
    %c0_2 = arith.constant 0 : index
    %c0_3 = arith.constant 0 : index
    %c0_4 = arith.constant 0 : index
    %2 = vector.load %arg3[%c0_2, %c0_3, %c0_4] : memref<1x128x128xf32, #tpu.memory_space<vmem>>, vector<1x128x128xf32>
    %3 = vector.shape_cast %2 : vector<1x128x128xf32> to vector<128x128xf32>
    %c0_5 = arith.constant 0 : index
    %c0_6 = arith.constant 0 : index
    %c0_7 = arith.constant 0 : index
    %4 = vector.load %arg4[%c0_5, %c0_6, %c0_7] : memref<1x1x128xf32, #tpu.memory_space<vmem>>, vector<1x1x128xf32>
    %5 = vector.shape_cast %4 : vector<1x1x128xf32> to vector<1x128xf32>
    %6 = vector.broadcast %1 : vector<128x1xf32> to vector<128x128xf32>
    %7 = arith.mulf %6, %3 : vector<128x128xf32>
    %8 = vector.broadcast %5 : vector<1x128xf32> to vector<128x128xf32>
    %9 = arith.mulf %7, %8 : vector<128x128xf32>
    %10 = vector.shape_cast %9 : vector<128x128xf32> to vector<1x128x128xf32>
    %cst = arith.constant dense<0.000000e+00> : vector<1xf32>
    %11 = vector.multi_reduction <add>, %10, %cst [1, 2] : vector<1x128x128xf32> to vector<1xf32>
    %12 = vector.shape_cast %11 : vector<1xf32> to vector<1x1x1xf32>
    %13 = vector.extract %12[0, 0, 0] : f32 from vector<1x1x1xf32>
    %14 = arith.negf %13 : f32
    %15 = math.exp %14 : f32
    %cst_8 = arith.constant 1.000000e+00 : f32
    %16 = arith.addf %cst_8, %15 : f32
    %17 = arith.divf %cst_8, %16 : f32
    %18 = vector.broadcast %17 : f32 to vector<1x128xf32>
    %c0_9 = arith.constant 0 : index
    %c0_10 = arith.constant 0 : index
    %c0_11 = arith.constant 0 : index
    %19 = vector.load %arg5[%c0_9, %c0_10, %c0_11] : memref<1x1x128xf32, #tpu.memory_space<vmem>>, vector<1x1x128xf32>
    %20 = vector.shape_cast %19 : vector<1x1x128xf32> to vector<1x128xf32>
    %21 = vector.shape_cast %18 : vector<1x128xf32> to vector<1x1x128xf32>
    tpu.vector_store %arg5[%c0_9, %c0_10, %c0_11], %21 {strides = array<i32>} : memref<1x1x128xf32, #tpu.memory_space<vmem>>, vector<1x1x128xf32>,
    return
  }
  func.func @transform_0(%arg0: i32, %arg1: memref<4xi32, #tpu.memory_space<smem>>) -> (i32, i32, i32) {
    %c0_i32 = arith.constant 0 : i32
    %c0_i32_0 = arith.constant 0 : i32
    %c0_i32_1 = arith.constant 0 : i32
    return %arg0, %c0_i32, %c0_i32_0 : i32, i32, i32
  }
  func.func @transform_1(%arg0: i32, %arg1: memref<4xi32, #tpu.memory_space<smem>>) -> (i32, i32, i32) {
    %0 = arith.index_cast %arg0 : i32 to index
    %1 = memref.load %arg1[%0] : memref<4xi32, #tpu.memory_space<smem>>
    %c0_i32 = arith.constant 0 : i32
    %c0_i32_0 = arith.constant 0 : i32
    %c0_i32_1 = arith.constant 0 : i32
    return %1, %c0_i32, %c0_i32_0 : i32, i32, i32
  }
  func.func @transform_2(%arg0: i32, %arg1: memref<4xi32, #tpu.memory_space<smem>>) -> (i32, i32, i32) {
    %c0_i32 = arith.constant 0 : i32
    %c0_i32_0 = arith.constant 0 : i32
    %c0_i32_1 = arith.constant 0 : i32
    return %arg0, %c0_i32, %c0_i32_0 : i32, i32, i32
  }
  func.func @transform_3(%arg0: i32, %arg1: memref<4xi32, #tpu.memory_space<smem>>) -> (i32, i32, i32) {
    %c0_i32 = arith.constant 0 : i32
    %c0_i32_0 = arith.constant 0 : i32
    %c0_i32_1 = arith.constant 0 : i32
    return %arg0, %c0_i32, %c0_i32_0 : i32, i32, i32
  }
}

</mosaic_0001>

<llo_original>
// kernel: tpu_custom_call.1
$region0: #{tpu_custom_call.1}
  #allocation0 [shape = 'u32[]', space=smem, size = 0x4, offset = 0x4, fixed_abs, tag = 'smem constant byte address 0x4 - core index']
  #allocation1 [shape = 'u32[144,128]{1,0:T(1,128)}', space=vmem, size = 0x12000, scoped, tag = 'internal scratch']
  #allocation2 [shape = 's32[1]{0}', space=sflag, size = 0x4, scoped, tag = 'scoped memory for tpu_custom_call.1']
  #allocation3 [shape = 'u8[512]{0}', space=smem, size = 0x200, scoped, tag = 'prefetched SMEM operand 0']
  %s0 = inlined_call_operand.vmem [shape: s32[4], index: 0, kind: input, shape index: {}]
  %s1 = inlined_call_operand.vmem [shape: f32[4,128,1], index: 1, kind: input, shape index: {}]
  %s2 = inlined_call_operand.vmem [shape: f32[4,128,128], index: 2, kind: input, shape index: {}]
  %s3 = inlined_call_operand.vmem [shape: f32[4,1,128], index: 3, kind: input, shape index: {}]
  %s4 = inlined_call_operand.hbm [shape: f32[4,1,128], index: 4, kind: output, shape index: {}]
  %s5 = sld [smem:[#allocation0]]
  $region45: #{tpu_custom_call.1} parent=0
    _
  %s7 = ssub.s32 1, %s5
  %s8 = scalar_select 0, %s7, %s5
  %s9 = sshll.u32 %s0, 4
  %s10 = int_to_ptr.vmem [resolvable:$true] %s9
  %12 = dma.vmem_to_smem %s10, 16, [#allocation3], [#allocation2]
  %13 = dma.done [#allocation2], 16
  %14 = sfence
  $region1: #{tpu_custom_call.1} parent=0
    #allocation4 [shape = 'u8[1024]{0}', space=vmem, size = 0x400, scoped, tag = 'output window, operand 0']
    #allocation5 [shape = 's32[2]{0}', space=sflag, size = 0x8, scoped, tag = 'scoped memory for tpu_custom_call.1']
    %15 = vsyncpa [#allocation5], 0
    %s16 = scalar_lea.sflag [#allocation5], 1
    %17 = vsyncpa %s16, 0
    loop: start=0, step=1, limit=6
    $region2: #{tpu_custom_call.1} parent=1 // loop_pre_header
      _
    $region3: #{tpu_custom_call.1} parent=1 // loop_header
      %s19 = sphi 0, %s23
      %p20 = scmp.ge.s32.totalorder %s19, 6
      %s29 = sphi 0, %s31
      %s32 = sphi 0, %s29
      %s33 = sphi 0, %s32
      %s49 = sphi 0, %s33
      %s57 = sphi 0, %s59
      %s60 = sphi 0, %s57
      %s61 = sphi 0, %s60
      %s77 = sphi 0, %s61
      %s83 = sphi 0, %s85
      %s86 = sphi 0, %s83
      %s87 = sphi 0, %s86
      %s103 = sphi 0, %s87
      %s109 = sphi 0, %s111
      %s112 = sphi 0, %s109
      %s113 = sphi 0, %s112
      %s129 = sphi 0, %s113
    $region4: #{tpu_custom_call.1} parent=1 // loop_header_branch
      %22 = sbr.rel (%p20) target = $region8
    $region5: #{tpu_custom_call.1} parent=1 // loop_body
      %s24 = ssub.s32 %s19, 1
      %s25 = ssub.s32 %s19, 2
      %s26 = sadd.s32 %s19, 1
      %s27 = ssub.s32 %s19, %s26
      %p28 = scmp.eq.s32.totalorder %s27, 0
      %s30 = sadd.s32 %s29, 1
      %s31 = scalar_select %p28, %s29, %s30
      %p34 = pneg %p28
      %p35 = scmp.eq.s32.totalorder %s19, 3
      %p36 = por %p34, %p35
      %p37 = scmp.ne.s32.totalorder %s29, %s32
      %p38 = scmp.eq.s32.totalorder %s19, 0
      %p39 = por %p37, %p38
      %p40 = scmp.ne.s32.totalorder %s29, %s32
      %p41 = scmp.eq.s32.totalorder %s24, 3
      %p42 = por %p40, %p41
      %p43 = scmp.ne.s32.totalorder %s32, %s33
      %p44 = scmp.eq.s32.totalorder %s24, 0
      %p45 = por %p43, %p44
      %p46 = scmp.ne.s32.totalorder %s32, %s33
      %p47 = scmp.eq.s32.totalorder %s25, 3
      %p48 = por %p46, %p47
      %p50 = scmp.ne.s32.totalorder %s33, %s49
      %p51 = scmp.eq.s32.totalorder %s25, 0
      %p52 = por %p50, %p51
      %s53 = sld [smem:[#allocation3 + %s19]]
      %s54 = sld [smem:[#allocation3 + %s26]]
      %s55 = ssub.s32 %s53, %s54
      %p56 = scmp.eq.s32.totalorder %s55, 0
      %s58 = sadd.s32 %s57, 1
      %s59 = scalar_select %p56, %s57, %s58
      %p62 = pneg %p56
      %p63 = scmp.eq.s32.totalorder %s19, 3
      %p64 = por %p62, %p63
      %p65 = scmp.ne.s32.totalorder %s57, %s60
      %p66 = scmp.eq.s32.totalorder %s19, 0
      %p67 = por %p65, %p66
      %p68 = scmp.ne.s32.totalorder %s57, %s60
      %p69 = scmp.eq.s32.totalorder %s24, 3
      %p70 = por %p68, %p69
      %p71 = scmp.ne.s32.totalorder %s60, %s61
      %p72 = scmp.eq.s32.totalorder %s24, 0
      %p73 = por %p71, %p72
      %p74 = scmp.ne.s32.totalorder %s60, %s61
      %p75 = scmp.eq.s32.totalorder %s25, 3
      %p76 = por %p74, %p75
      %p78 = scmp.ne.s32.totalorder %s61, %s77
      %p79 = scmp.eq.s32.totalorder %s25, 0
      %p80 = por %p78, %p79
      %s81 = ssub.s32 %s19, %s26
      %p82 = scmp.eq.s32.totalorder %s81, 0
      %s84 = sadd.s32 %s83, 1
      %s85 = scalar_select %p82, %s83, %s84
      %p88 = pneg %p82
      %p89 = scmp.eq.s32.totalorder %s19, 3
      %p90 = por %p88, %p89
      %p91 = scmp.ne.s32.totalorder %s83, %s86
      %p92 = scmp.eq.s32.totalorder %s19, 0
      %p93 = por %p91, %p92
      %p94 = scmp.ne.s32.totalorder %s83, %s86
      %p95 = scmp.eq.s32.totalorder %s24, 3
      %p96 = por %p94, %p95
      %p97 = scmp.ne.s32.totalorder %s86, %s87
      %p98 = scmp.eq.s32.totalorder %s24, 0
      %p99 = por %p97, %p98
      %p100 = scmp.ne.s32.totalorder %s86, %s87
      %p101 = scmp.eq.s32.totalorder %s25, 3
      %p102 = por %p100, %p101
      %p104 = scmp.ne.s32.totalorder %s87, %s103
      %p105 = scmp.eq.s32.totalorder %s25, 0
      %p106 = por %p104, %p105
      %s107 = ssub.s32 %s19, %s26
      %p108 = scmp.eq.s32.totalorder %s107, 0
      %s110 = sadd.s32 %s109, 1
      %s111 = scalar_select %p108, %s109, %s110
      %p114 = pneg %p108
      %p115 = scmp.eq.s32.totalorder %s19, 3
      %p116 = por %p114, %p115
      %p117 = scmp.ne.s32.totalorder %s109, %s112
      %p118 = scmp.eq.s32.totalorder %s19, 0
      %p119 = por %p117, %p118
      %p120 = scmp.ne.s32.totalorder %s109, %s112
      %p121 = scmp.eq.s32.totalorder %s24, 3
      %p122 = por %p120, %p121
      %p123 = scmp.ne.s32.totalorder %s112, %s113
      %p124 = scmp.eq.s32.totalorder %s24, 0
      %p125 = por %p123, %p124
      %p126 = scmp.ne.s32.totalorder %s112, %s113
      %p127 = scmp.eq.s32.totalorder %s25, 3
      %p128 = por %p126, %p127
      %p130 = scmp.ne.s32.totalorder %s113, %s129
      %p131 = scmp.eq.s32.totalorder %s25, 0
      %p132 = por %p130, %p131
      %p133 = scmp.le.s32.totalorder 1, %s19
      %p134 = scmp.lt.s32.totalorder %s19, 5
      %p135 = pnand %p133, %p134
      %p136 = pneg %p135
      // Predicated region
      $region9: #{tpu_custom_call.1} parent=5 // pred_check
        _
      $region10: #{tpu_custom_call.1} parent=5 // pred_check_branch
        %138 = sbr.rel (%p135) target = $region12
      $region11: #{tpu_custom_call.1} parent=5 // pred_region
        %s139 = ssub.s32 %s19, 1
      $region12: #{tpu_custom_call.1} parent=5 // pred_fallthru
        _
      %p140 = scmp.lt.s32.totalorder %s19, 4
      // Predicated region
      $region13: #{tpu_custom_call.1} parent=5 // pred_check
        %p141 = pneg %p140
      $region14: #{tpu_custom_call.1} parent=5 // pred_check_branch
        %143 = sbr.rel (%p141) target = $region16
      $region15: #{tpu_custom_call.1} parent=5 // pred_region
        // Predicated region
        $region17: #{tpu_custom_call.1} parent=15 // pred_check
          %p144 = pneg %p39
        $region18: #{tpu_custom_call.1} parent=15 // pred_check_branch
          %146 = sbr.rel (%p144) target = $region20
        $region19: #{tpu_custom_call.1} parent=15 // pred_region
          %p147 = scmp.lt.s32.totalorder %s19, 3
          %s148 = scalar_select %p147, %s19, 3
          %s149 = smul.addr %s148, 16
          %s150 = smul.addr %s149, 8
          %s151 = scalar_lea.vmem %s1, %s150
        $region20: #{tpu_custom_call.1} parent=15 // pred_fallthru
          _
        // Predicated region
        $region21: #{tpu_custom_call.1} parent=15 // pred_check
          %p152 = pneg %p67
        $region22: #{tpu_custom_call.1} parent=15 // pred_check_branch
          %154 = sbr.rel (%p152) target = $region24
        $region23: #{tpu_custom_call.1} parent=15 // pred_region
          %s155 = sld [smem:[#allocation3 + %s19]]
          %p156 = scmp.lt.s32.totalorder %s155, 3
          %s157 = scalar_select %p156, %s155, 3
          %s158 = smul.addr %s157, 16
          %s159 = smul.addr %s158, 8
          %s160 = scalar_lea.vmem %s2, %s159
          %s161 = sld [smem:[#allocation3 + %s19]]
        $region24: #{tpu_custom_call.1} parent=15 // pred_fallthru
          _
        // Predicated region
        $region25: #{tpu_custom_call.1} parent=15 // pred_check
          %p162 = pneg %p93
        $region26: #{tpu_custom_call.1} parent=15 // pred_check_branch
          %164 = sbr.rel (%p162) target = $region28
        $region27: #{tpu_custom_call.1} parent=15 // pred_region
          %p165 = scmp.lt.s32.totalorder %s19, 3
          %s166 = scalar_select %p165, %s19, 3
          %s167 = scalar_lea.vmem %s3, %s166
        $region28: #{tpu_custom_call.1} parent=15 // pred_fallthru
          _
      $region16: #{tpu_custom_call.1} parent=5 // pred_fallthru
        _
      %p168 = scmp.le.s32.totalorder 1, %s19
      %p169 = scmp.lt.s32.totalorder %s19, 5
      %p170 = pnand %p168, %p169
      %p171 = pneg %p170
      // Predicated region
      $region29: #{tpu_custom_call.1} parent=5 // pred_check
        _
      $region30: #{tpu_custom_call.1} parent=5 // pred_check_branch
        %173 = sbr.rel (%p170) target = $region32
      $region31: #{tpu_custom_call.1} parent=5 // pred_region
        %s174 = ssub.s32 %s19, 1
        %p175 = scmp.lt.s32.totalorder %s24, 3
        %s176 = scalar_select %p175, %s24, 3
        %s177 = smul.addr %s176, 16
        %s178 = smul.addr %s177, 8
        %s179 = scalar_lea.vmem %s1, %s178
        %p180 = pneg %p45
        %p181 = pneg %p42
        %s182 = sld [smem:[#allocation3 + %s24]]
        %p183 = scmp.lt.s32.totalorder %s182, 3
        %s184 = scalar_select %p183, %s182, 3
        %s185 = smul.addr %s184, 16
        %s186 = smul.addr %s185, 8
        %s187 = scalar_lea.vmem %s2, %s186
        %p188 = pneg %p73
        %p189 = pneg %p70
        %p190 = scmp.lt.s32.totalorder %s24, 3
        %s191 = scalar_select %p190, %s24, 3
        %s192 = scalar_lea.vmem %s3, %s191
        %p193 = pneg %p99
        %p194 = pneg %p96
        %p195 = pneg %p125
        %p196 = pneg %p122
        %s197 = sand.u32 %s112, 1
        %s198 = scalar_lea.sflag [#allocation5], %s197
        %s199 = sand.u32 %s112, 1
        %s200 = scalar_lea.vmem [#allocation4], %s199
        %p201 = scmp.lt.s32.totalorder %s24, 3
        %s202 = scalar_select %p201, %s24, 3
        %s203 = smul.addr %s202, 16
        %s204 = smul.addr %s203, 8
        %s205 = scalar_lea.vmem %s1, %s204
        %s206 = sld [smem:[#allocation3 + %s24]]
        %p207 = scmp.lt.s32.totalorder %s206, 3
        %s208 = scalar_select %p207, %s206, 3
        %s209 = smul.addr %s208, 16
        %s210 = smul.addr %s209, 8
        %s211 = scalar_lea.vmem %s2, %s210
        %s212 = sld [smem:[#allocation3 + %s24]]
        %p213 = scmp.lt.s32.totalorder %s24, 3
        %s214 = scalar_select %p213, %s24, 3
        %s215 = scalar_lea.vmem %s3, %s214
        %v216 = vld [vmem:[%s205] sm:$0xff]
        %v217 = vld [vmem:[%s205 + $0x8] sm:$0xff]
        %v218 = vld [vmem:[%s205 + $0x10] sm:$0xff]
        %v219 = vld [vmem:[%s205 + $0x18] sm:$0xff]
        %v220 = vld [vmem:[%s205 + $0x20] sm:$0xff]
        %v221 = vld [vmem:[%s205 + $0x28] sm:$0xff]
        %v222 = vld [vmem:[%s205 + $0x30] sm:$0xff]
        %v223 = vld [vmem:[%s205 + $0x38] sm:$0xff]
        %v224 = vld [vmem:[%s205 + $0x40] sm:$0xff]
        %v225 = vld [vmem:[%s205 + $0x48] sm:$0xff]
        %v226 = vld [vmem:[%s205 + $0x50] sm:$0xff]
        %v227 = vld [vmem:[%s205 + $0x58] sm:$0xff]
        %v228 = vld [vmem:[%s205 + $0x60] sm:$0xff]
        %v229 = vld [vmem:[%s205 + $0x68] sm:$0xff]
        %v230 = vld [vmem:[%s205 + $0x70] sm:$0xff]
        %v231 = vld [vmem:[%s205 + $0x78] sm:$0xff]
        %v232 = vld [vmem:[%s211] sm:$0xff]
        %v233 = vld [vmem:[%s211 + $0x8] sm:$0xff]
        %v234 = vld [vmem:[%s211 + $0x10] sm:$0xff]
        %v235 = vld [vmem:[%s211 + $0x18] sm:$0xff]
        %v236 = vld [vmem:[%s211 + $0x20] sm:$0xff]
        %v237 = vld [vmem:[%s211 + $0x28] sm:$0xff]
        %v238 = vld [vmem:[%s211 + $0x30] sm:$0xff]
        %v239 = vld [vmem:[%s211 + $0x38] sm:$0xff]
        %v240 = vld [vmem:[%s211 + $0x40] sm:$0xff]
        %v241 = vld [vmem:[%s211 + $0x48] sm:$0xff]
        %v242 = vld [vmem:[%s211 + $0x50] sm:$0xff]
        %v243 = vld [vmem:[%s211 + $0x58] sm:$0xff]
        %v244 = vld [vmem:[%s211 + $0x60] sm:$0xff]
        %v245 = vld [vmem:[%s211 + $0x68] sm:$0xff]
        %v246 = vld [vmem:[%s211 + $0x70] sm:$0xff]
        %v247 = vld [vmem:[%s211 + $0x78] sm:$0xff]
        %v248 = vld [vmem:[%s215] sm:$0x1]
        %250 = vset.pattern.permute.xlu0 0
        %251 = vperm.xlu0 %250, %v216
        %v252 = vpop.permute.xlu0 %251
        %255 = vset.pattern.permute.xlu0 0
        %256 = vperm.xlu0 %255, %v217
        %v257 = vpop.permute.xlu0 %256
        %260 = vset.pattern.permute.xlu0 0
        %261 = vperm.xlu0 %260, %v218
        %v262 = vpop.permute.xlu0 %261
        %265 = vset.pattern.permute.xlu0 0
        %266 = vperm.xlu0 %265, %v219
        %v267 = vpop.permute.xlu0 %266
        %270 = vset.pattern.permute.xlu0 0
        %271 = vperm.xlu0 %270, %v220
        %v272 = vpop.permute.xlu0 %271
        %275 = vset.pattern.permute.xlu0 0
        %276 = vperm.xlu0 %275, %v221
        %v277 = vpop.permute.xlu0 %276
        %280 = vset.pattern.permute.xlu0 0
        %281 = vperm.xlu0 %280, %v222
        %v282 = vpop.permute.xlu0 %281
        %285 = vset.pattern.permute.xlu0 0
        %286 = vperm.xlu0 %285, %v223
        %v287 = vpop.permute.xlu0 %286
        %290 = vset.pattern.permute.xlu0 0
        %291 = vperm.xlu0 %290, %v224
        %v292 = vpop.permute.xlu0 %291
        %295 = vset.pattern.permute.xlu0 0
        %296 = vperm.xlu0 %295, %v225
        %v297 = vpop.permute.xlu0 %296
        %300 = vset.pattern.permute.xlu0 0
        %301 = vperm.xlu0 %300, %v226
        %v302 = vpop.permute.xlu0 %301
        %305 = vset.pattern.permute.xlu0 0
        %306 = vperm.xlu0 %305, %v227
        %v307 = vpop.permute.xlu0 %306
        %310 = vset.pattern.permute.xlu0 0
        %311 = vperm.xlu0 %310, %v228
        %v312 = vpop.permute.xlu0 %311
        %315 = vset.pattern.permute.xlu0 0
        %316 = vperm.xlu0 %315, %v229
        %v317 = vpop.permute.xlu0 %316
        %320 = vset.pattern.permute.xlu0 0
        %321 = vperm.xlu0 %320, %v230
        %v322 = vpop.permute.xlu0 %321
        %325 = vset.pattern.permute.xlu0 0
        %326 = vperm.xlu0 %325, %v231
        %v327 = vpop.permute.xlu0 %326
        %v329 = vmul.f32 %v252, %v232
        %v330 = vmul.f32 %v257, %v233
        %v331 = vmul.f32 %v262, %v234
        %v332 = vmul.f32 %v267, %v235
        %v333 = vmul.f32 %v272, %v236
        %v334 = vmul.f32 %v277, %v237
        %v335 = vmul.f32 %v282, %v238
        %v336 = vmul.f32 %v287, %v239
        %v337 = vmul.f32 %v292, %v240
        %v338 = vmul.f32 %v297, %v241
        %v339 = vmul.f32 %v302, %v242
        %v340 = vmul.f32 %v307, %v243
        %v341 = vmul.f32 %v312, %v244
        %v342 = vmul.f32 %v317, %v245
        %v343 = vmul.f32 %v322, %v246
        %v344 = vmul.f32 %v327, %v247
        %v346 = vlaneseq
        %v347 = vshrl.u32 %v346, 7
        %v348 = vsub.s32 0, %v347
        %v349 = vrot.slane %v248, %v348
        %v351 = vmul.f32 %v329, %v349
        %v352 = vmul.f32 %v330, %v349
        %v353 = vmul.f32 %v331, %v349
        %v354 = vmul.f32 %v332, %v349
        %v355 = vmul.f32 %v333, %v349
        %v356 = vmul.f32 %v334, %v349
        %v357 = vmul.f32 %v335, %v349
        %v358 = vmul.f32 %v336, %v349
        %v359 = vmul.f32 %v337, %v349
        %v360 = vmul.f32 %v338, %v349
        %v361 = vmul.f32 %v339, %v349
        %v362 = vmul.f32 %v340, %v349
        %v363 = vmul.f32 %v341, %v349
        %v364 = vmul.f32 %v342, %v349
        %v365 = vmul.f32 %v343, %v349
        %v366 = vmul.f32 %v344, %v349
        %v367 = vadd.f32 %v351, %v352
        %v368 = vadd.f32 %v367, %v353
        %v369 = vadd.f32 %v368, %v354
        %v370 = vadd.f32 %v369, %v355
        %v371 = vadd.f32 %v370, %v356
        %v372 = vadd.f32 %v371, %v357
        %v373 = vadd.f32 %v372, %v358
        %v374 = vadd.f32 %v373, %v359
        %v375 = vadd.f32 %v374, %v360
        %v376 = vadd.f32 %v375, %v361
        %v377 = vadd.f32 %v376, %v362
        %v378 = vadd.f32 %v377, %v363
        %v379 = vadd.f32 %v378, %v364
        %v380 = vadd.f32 %v379, %v365
        %v381 = vadd.f32 %v380, %v366
        %382 = vadd.xlane.f32.xlu0 %v381
        %v383 = vpop.xlane.xlu0 %382
        %v384 = vrot.slane %v383, 4
        %v385 = vadd.f32 %v383, %v384
        %v386 = vrot.slane %v385, 2
        %v387 = vadd.f32 %v385, %v386
        %v388 = vrot.slane %v387, 1
        %v389 = vadd.f32 %v387, %v388
        %s390 = vtos %v389
        %s391 = sxor.u32 %s390, 2147483648
        %v392 = vstv %s391
        %v393 = vmul.f32 %v392, 1.442695
        %v394 = vpow.pop %v393
        %s395 = vtos %v394
        %s396 = sadd.f32 %s395, 1.0
        %v397 = vstv %s396
        %v398 = vrcp.pop %v397
        %s399 = vtos %v398
        %v400 = vstv %s399
        %401 = vst [vmem:[%s200] sm:$0x1] %v400
        %s402 = sand.u32 %s112, 1
        %s403 = scalar_lea.sflag [#allocation5], %s402
        %s404 = sand.u32 %s112, 1
        %s405 = scalar_lea.vmem [#allocation4], %s404
        // Predicated region
        $region33: #{tpu_custom_call.1} parent=31 // pred_check
          %p406 = pneg %p122
        $region34: #{tpu_custom_call.1} parent=31 // pred_check_branch
          %408 = sbr.rel (%p406) target = $region36
        $region35: #{tpu_custom_call.1} parent=31 // pred_region
          %s410 = ssub.s32 16, 16
          %411 = vsyncadd %s403, %s410
          %s412 = smul.addr %s24, 16
          %s413 = scalar_lea.hbm %s4, %s412
          %s415 = sshll.u32 %s405, 4
          %s416 = int_to_ptr.vmem [resolvable:$true] %s415
          %418 = dma.vmem_to_hbm [thread:$0]  %s416, 16, %s413, %s403
        $region36: #{tpu_custom_call.1} parent=31 // pred_fallthru
          _
      $region32: #{tpu_custom_call.1} parent=5 // pred_fallthru
        _
      %p419 = scmp.le.s32.totalorder 2, %s19
      // Predicated region
      $region37: #{tpu_custom_call.1} parent=5 // pred_check
        %p420 = pneg %p419
      $region38: #{tpu_custom_call.1} parent=5 // pred_check_branch
        %422 = sbr.rel (%p420) target = $region40
      $region39: #{tpu_custom_call.1} parent=5 // pred_region
        %s423 = ssub.s32 %s19, 2
        // Predicated region
        $region41: #{tpu_custom_call.1} parent=39 // pred_check
          %p424 = pneg %p128
        $region42: #{tpu_custom_call.1} parent=39 // pred_check_branch
          %426 = sbr.rel (%p424) target = $region44
        $region43: #{tpu_custom_call.1} parent=39 // pred_region
          %s427 = sand.u32 %s113, 1
          %s428 = scalar_lea.sflag [#allocation5], %s427
          %s429 = sand.u32 %s113, 1
          %s430 = scalar_lea.vmem [#allocation4], %s429
          %431 = dma.done %s428, 16
        $region44: #{tpu_custom_call.1} parent=39 // pred_fallthru
          _
      $region40: #{tpu_custom_call.1} parent=5 // pred_fallthru
        _
    $region6: #{tpu_custom_call.1} parent=1 // loop_footer
      %s23 = sadd.s32 1, %s19
    $region7: #{tpu_custom_call.1} parent=1 // loop_footer_branch
      %18 = sbr.rel target = $region3
    $region8: #{tpu_custom_call.1} parent=1 // loop_exit
      _
    %432 = vsyncpa [#allocation5], 1
    %s433 = scalar_lea.sflag [#allocation5], 1
    %434 = vsyncpa %s433, 1

</llo_original>
